<compile_context>
chip_gen: v6e
topology: v6e:2x2x1
jax: 0.10.0
libtpu: 0.0.40
codegen_flags: <defaults>
</compile_context>

<pallas_src>
import functools

import jax
import jax.numpy as jnp
from jax.experimental import pallas as pl
from jax.experimental.pallas import tpu as pltpu

H1 = 128          # fc1 out features (already lane-aligned)
H2 = 84           # fc2 out features (logical)
H2_PAD = 128      # fc2 out features padded to a full lane width
NA_PAD = 128      # fc3 out features padded to a full lane width (for the MXU only)
TB_MAX = 4096     # max batch-tile rows


def _round_up(n, m):
    return ((n + m - 1) // m) * m


def patnet_kernel(x_ref, w1_ref, b1_ref, w2_ref, b2_ref, w3_ref, b3_ref, o_ref):
    # x arrives in f32 straight from HBM; bf16 cast for the MXU is a free VPU op here.
    x = x_ref[...].astype(jnp.bfloat16)
    # fc1 + relu (bf16 MXU inputs, f32 accumulate / bias / relu)
    h1 = jnp.dot(x, w1_ref[...], preferred_element_type=jnp.float32)
    h1 = jnp.maximum(h1 + b1_ref[...], 0.0).astype(jnp.bfloat16)
    # fc2 + relu (out features zero-padded 84 -> 128; padded columns stay exactly zero)
    h2 = jnp.dot(h1, w2_ref[...], preferred_element_type=jnp.float32)
    h2 = jnp.maximum(h2 + b2_ref[...], 0.0).astype(jnp.bfloat16)
    # fc3 (no activation): Q(s, a)
    q = jnp.dot(h2, w3_ref[...], preferred_element_type=jnp.float32) + b3_ref[...]
    # Transposed, lane-dense output: batch goes to the lane dim and only the first
    # round_up(nA, 8) rows are written -> ~32 B/row HBM writeback instead of 512 B/row.
    na_sub = o_ref.shape[0]
    qt = q.T                                     # (NA_PAD, TB) f32; 128x128 XLU transposes
    o_ref[...] = qt[:na_sub, :].astype(o_ref.dtype)


def prepare_params(w1, b1, w2, b2, w3, b3):
    """One-time pad/cast of PatNet parameters (hoisted out of the per-call forward).

    w_i: (in, out) f32, b_i: (1, out) f32 as in torch Linear (already transposed to (in, out)).
    Returns (prepped_params_tuple, nA).
    """
    nA = w3.shape[1]
    assert nA <= NA_PAD, "nA must be <= 128 for this kernel"
    w1p = w1.astype(jnp.bfloat16)                                                 # (nS, 128)
    b1p = b1.astype(jnp.float32)                                                  # (1, 128)
    w2p = jnp.pad(w2, ((0, 0), (0, H2_PAD - H2))).astype(jnp.bfloat16)            # (128, 128)
    b2p = jnp.pad(b2, ((0, 0), (0, H2_PAD - H2))).astype(jnp.float32)             # (1, 128)
    w3p = jnp.pad(w3, ((0, H2_PAD - H2), (0, NA_PAD - nA))).astype(jnp.bfloat16)  # (128, 128)
    b3p = jnp.pad(b3, ((0, 0), (0, NA_PAD - nA))).astype(jnp.float32)             # (1, 128)
    return (w1p, b1p, w2p, b2p, w3p, b3p), nA


@functools.partial(jax.jit, static_argnames=("n_actions",))
def patnet_forward(x, prepped, n_actions):
    """x: (B, nS) f32; prepped from prepare_params. Returns Q(s, a): (B, nA) f32."""
    w1p, b1p, w2p, b2p, w3p, b3p = prepped
    B, nS = x.shape
    nA = n_actions
    na_sub = _round_up(nA, 8)             # sublane-aligned rows of the transposed output

    # --- batch tiling: multiples of 128 so the batch is lane-dense on the transposed output.
    B128 = _round_up(B, 128)
    n_tiles = -(-B128 // TB_MAX)          # cdiv
    if n_tiles == 1 and B128 >= 256:
        n_tiles = 2                       # feed both TensorCores on v7x (noise on v5e/v6e)
    TB = _round_up(-(-B128 // n_tiles), 128)
    B_pad = n_tiles * TB
    x_in = x if B_pad == B else jnp.pad(x, ((0, B_pad - B), (0, 0)))

    def resident(shape):  # constant block index -> weights stay VMEM-resident across the grid
        return pl.BlockSpec(shape, lambda i: (0, 0))

    flops = 2 * B_pad * (nS * H1 + H1 * H2_PAD + H2_PAD * NA_PAD)
    bytes_accessed = (
        B_pad * nS * 4
        + (w1p.size + w2p.size + w3p.size) * 2
        + (b1p.size + b2p.size + b3p.size) * 4
        + na_sub * B_pad * 4
    )

    out_t = pl.pallas_call(
        patnet_kernel,
        out_shape=jax.ShapeDtypeStruct((na_sub, B_pad), jnp.float32),
        grid=(n_tiles,),
        in_specs=[
            pl.BlockSpec((TB, nS), lambda i: (i, 0)),   # x: pipelined over the batch
            resident((nS, H1)),
            resident((1, H1)),
            resident((H1, H2_PAD)),
            resident((1, H2_PAD)),
            resident((H2_PAD, NA_PAD)),
            resident((1, NA_PAD)),
        ],
        out_specs=pl.BlockSpec((na_sub, TB), lambda i: (0, i)),
        compiler_params=pltpu.CompilerParams(
            dimension_semantics=("parallel",),
            vmem_limit_bytes=64 * 1024 * 1024,
        ),
        cost_estimate=pl.CostEstimate(
            flops=flops, transcendentals=0, bytes_accessed=bytes_accessed
        ),
    )(x_in, w1p, b1p, w2p, b2p, w3p, b3p)

    # (nA, B) -> (B, nA): tiny compared to the kernel's HBM streams.
    return out_t[:nA, :B].T


def init_params(key, nS, nA):
    """Deterministic init mimicking torch.nn.Linear default (U[-1/sqrt(fan_in), 1/sqrt(fan_in)])."""
    dims = [(nS, H1), (H1, H2), (H2, nA)]
    params = []
    for fan_in, fan_out in dims:
        k_w, k_b, key = jax.random.split(key, 3)
        bound = 1.0 / jnp.sqrt(jnp.float32(fan_in))
        w = jax.random.uniform(k_w, (fan_in, fan_out), jnp.float32, -bound, bound)
        b = jax.random.uniform(k_b, (1, fan_out), jnp.float32, -bound, bound)
        params += [w, b]
    return params


def patnet_ref(x, w1, b1, w2, b2, w3, b3):
    """Pure-JAX reference mirroring the kernel numerics (bf16 MXU inputs, f32 accumulate).

    Note: numerics intentionally differ from pure-f32 PyTorch by bf16 input quantization.
    """
    h1 = jnp.maximum(
        jnp.dot(x.astype(jnp.bfloat16), w1.astype(jnp.bfloat16),
                preferred_element_type=jnp.float32) + b1, 0.0)
    h2 = jnp.maximum(
        jnp.dot(h1.astype(jnp.bfloat16), w2.astype(jnp.bfloat16),
                preferred_element_type=jnp.float32) + b2, 0.0)
    return jnp.dot(h2.astype(jnp.bfloat16), w3.astype(jnp.bfloat16),
                   preferred_element_type=jnp.float32) + b3


if __name__ == "__main__":
    key = jax.random.PRNGKey(0)
    B, nS, nA = 8, 32, 4  # small synthetic shapes: batch=8, obs dim=32, actions=4

    k_x, k_p = jax.random.split(key)
    x = jax.random.normal(k_x, (B, nS), jnp.float32)
    params = init_params(k_p, nS, nA)

    prepped, n_actions = prepare_params(*params)
    q = patnet_forward(x, prepped, n_actions)
    jax.block_until_ready(q)

    q_ref = patnet_ref(x, *params)
    assert q.shape == (B, nA)
    assert jnp.allclose(q, q_ref, atol=2e-3, rtol=2e-3)
    # Q-argmax (action selection) must also agree with the reference.
    assert jnp.array_equal(jnp.argmax(q, axis=-1), jnp.argmax(q_ref, axis=-1))

    print("KERNEL_OK")
</pallas_src>

<mosaic_0001>
module attributes {stable_mosaic.version = 11 : i64} {
  func.func @patnet_kernel(%arg0: i32, %arg1: memref<128x32xf32, #tpu.memory_space<vmem>>, %arg2: memref<32x128xbf16, #tpu.memory_space<vmem>>, %arg3: memref<1x128xf32, #tpu.memory_space<vmem>>, %arg4: memref<128x128xbf16, #tpu.memory_space<vmem>>, %arg5: memref<1x128xf32, #tpu.memory_space<vmem>>, %arg6: memref<128x128xbf16, #tpu.memory_space<vmem>>, %arg7: memref<1x128xf32, #tpu.memory_space<vmem>>, %arg8: memref<8x128xf32, #tpu.memory_space<vmem>>) attributes {dimension_semantics = [#tpu.dimension_semantics<parallel>], iteration_bounds = array<i64: 1>, scalar_prefetch = 0 : i64, scratch_operands = 0 : i64, tpu.core_type = #tpu.core_type<tc>, window_params = [{transform_indices = @transform_0, window_bounds = array<i64: 128, 32>}, {pipeline_mode = #tpu.pipeline_mode<synchronous>, transform_indices = @transform_1, window_bounds = array<i64: 32, 128>}, {pipeline_mode = #tpu.pipeline_mode<synchronous>, transform_indices = @transform_2, window_bounds = array<i64: 1, 128>}, {pipeline_mode = #tpu.pipeline_mode<synchronous>, transform_indices = @transform_3, window_bounds = array<i64: 128, 128>}, {pipeline_mode = #tpu.pipeline_mode<synchronous>, transform_indices = @transform_4, window_bounds = array<i64: 1, 128>}, {pipeline_mode = #tpu.pipeline_mode<synchronous>, transform_indices = @transform_5, window_bounds = array<i64: 128, 128>}, {pipeline_mode = #tpu.pipeline_mode<synchronous>, transform_indices = @transform_6, window_bounds = array<i64: 1, 128>}, {transform_indices = @transform_7, window_bounds = array<i64: 8, 128>}]} {
    %c0 = arith.constant 0 : index
    %c0_0 = arith.constant 0 : index
    %0 = vector.load %arg1[%c0, %c0_0] : memref<128x32xf32, #tpu.memory_space<vmem>>, vector<128x32xf32>
    %1 = arith.truncf %0 : vector<128x32xf32> to vector<128x32xbf16>
    %c0_1 = arith.constant 0 : index
    %c0_2 = arith.constant 0 : index
    %2 = vector.load %arg2[%c0_1, %c0_2] : memref<32x128xbf16, #tpu.memory_space<vmem>>, vector<32x128xbf16>
    %cst = arith.constant dense<0.000000e+00> : vector<128x128xf32>
    %3 = tpu.matmul %1, %2, %cst {dimension_numbers = #tpu.dot_dimension_numbers<[1], [0], [0], [1], [0, 0, 1, 1], [], []>} : vector<128x32xbf16>, vector<32x128xbf16>, vector<128x128xf32> -> vector<128x128xf32>
    %c0_3 = arith.constant 0 : index
    %c0_4 = arith.constant 0 : index
    %4 = vector.load %arg3[%c0_3, %c0_4] : memref<1x128xf32, #tpu.memory_space<vmem>>, vector<1x128xf32>
    %5 = vector.broadcast %4 : vector<1x128xf32> to vector<128x128xf32>
    %6 = arith.addf %3, %5 : vector<128x128xf32>
    %cst_5 = arith.constant 0.000000e+00 : f32
    %7 = vector.broadcast %cst_5 : f32 to vector<128x128xf32>
    %8 = arith.maximumf %6, %7 : vector<128x128xf32>
    %9 = arith.truncf %8 : vector<128x128xf32> to vector<128x128xbf16>
    %c0_6 = arith.constant 0 : index
    %c0_7 = arith.constant 0 : index
    %10 = vector.load %arg4[%c0_6, %c0_7] : memref<128x128xbf16, #tpu.memory_space<vmem>>, vector<128x128xbf16>
    %cst_8 = arith.constant dense<0.000000e+00> : vector<128x128xf32>
    %11 = tpu.matmul %9, %10, %cst_8 {dimension_numbers = #tpu.dot_dimension_numbers<[1], [0], [0], [1], [0, 0, 1, 1], [], []>} : vector<128x128xbf16>, vector<128x128xbf16>, vector<128x128xf32> -> vector<128x128xf32>
    %c0_9 = arith.constant 0 : index
    %c0_10 = arith.constant 0 : index
    %12 = vector.load %arg5[%c0_9, %c0_10] : memref<1x128xf32, #tpu.memory_space<vmem>>, vector<1x128xf32>
    %13 = vector.broadcast %12 : vector<1x128xf32> to vector<128x128xf32>
    %14 = arith.addf %11, %13 : vector<128x128xf32>
    %cst_11 = arith.constant 0.000000e+00 : f32
    %15 = vector.broadcast %cst_11 : f32 to vector<128x128xf32>
    %16 = arith.maximumf %14, %15 : vector<128x128xf32>
    %17 = arith.truncf %16 : vector<128x128xf32> to vector<128x128xbf16>
    %c0_12 = arith.constant 0 : index
    %c0_13 = arith.constant 0 : index
    %18 = vector.load %arg6[%c0_12, %c0_13] : memref<128x128xbf16, #tpu.memory_space<vmem>>, vector<128x128xbf16>
    %cst_14 = arith.constant dense<0.000000e+00> : vector<128x128xf32>
    %19 = tpu.matmul %17, %18, %cst_14 {dimension_numbers = #tpu.dot_dimension_numbers<[1], [0], [0], [1], [0, 0, 1, 1], [], []>} : vector<128x128xbf16>, vector<128x128xbf16>, vector<128x128xf32> -> vector<128x128xf32>
    %c0_15 = arith.constant 0 : index
    %c0_16 = arith.constant 0 : index
    %20 = vector.load %arg7[%c0_15, %c0_16] : memref<1x128xf32, #tpu.memory_space<vmem>>, vector<1x128xf32>
    %21 = vector.broadcast %20 : vector<1x128xf32> to vector<128x128xf32>
    %22 = arith.addf %19, %21 : vector<128x128xf32>
    %23 = tpu.transpose %22, [1, 0] : vector<128x128xf32> -> vector<128x128xf32>
    %24 = vector.extract_strided_slice %23 {offsets = [0, 0], sizes = [8, 128], strides = [1, 1]} : vector<128x128xf32> to vector<8x128xf32>
    %c0_17 = arith.constant 0 : index
    %c0_18 = arith.constant 0 : index
    %25 = vector.load %arg8[%c0_17, %c0_18] : memref<8x128xf32, #tpu.memory_space<vmem>>, vector<8x128xf32>
    tpu.vector_store %arg8[%c0_17, %c0_18], %24 {strides = array<i32>} : memref<8x128xf32, #tpu.memory_space<vmem>>, vector<8x128xf32>,
    return
  }
  func.func @transform_0(%arg0: i32) -> (i32, i32) {
    %c0_i32 = arith.constant 0 : i32
    %c0_i32_0 = arith.constant 0 : i32
    return %arg0, %c0_i32 : i32, i32
  }
  func.func @transform_1(%arg0: i32) -> (i32, i32) {
    %c0_i32 = arith.constant 0 : i32
    %c0_i32_0 = arith.constant 0 : i32
    %c0_i32_1 = arith.constant 0 : i32
    return %c0_i32, %c0_i32_0 : i32, i32
  }
  func.func @transform_2(%arg0: i32) -> (i32, i32) {
    %c0_i32 = arith.constant 0 : i32
    %c0_i32_0 = arith.constant 0 : i32
    %c0_i32_1 = arith.constant 0 : i32
    return %c0_i32, %c0_i32_0 : i32, i32
  }
  func.func @transform_3(%arg0: i32) -> (i32, i32) {
    %c0_i32 = arith.constant 0 : i32
    %c0_i32_0 = arith.constant 0 : i32
    %c0_i32_1 = arith.constant 0 : i32
    return %c0_i32, %c0_i32_0 : i32, i32
  }
  func.func @transform_4(%arg0: i32) -> (i32, i32) {
    %c0_i32 = arith.constant 0 : i32
    %c0_i32_0 = arith.constant 0 : i32
    %c0_i32_1 = arith.constant 0 : i32
    return %c0_i32, %c0_i32_0 : i32, i32
  }
  func.func @transform_5(%arg0: i32) -> (i32, i32) {
    %c0_i32 = arith.constant 0 : i32
    %c0_i32_0 = arith.constant 0 : i32
    %c0_i32_1 = arith.constant 0 : i32
    return %c0_i32, %c0_i32_0 : i32, i32
  }
  func.func @transform_6(%arg0: i32) -> (i32, i32) {
    %c0_i32 = arith.constant 0 : i32
    %c0_i32_0 = arith.constant 0 : i32
    %c0_i32_1 = arith.constant 0 : i32
    return %c0_i32, %c0_i32_0 : i32, i32
  }
  func.func @transform_7(%arg0: i32) -> (i32, i32) {
    %c0_i32 = arith.constant 0 : i32
    %c0_i32_0 = arith.constant 0 : i32
    return %c0_i32, %arg0 : i32, i32
  }
}

</mosaic_0001>

<llo_original>
// kernel: patnet_forward.1
$region0: #{patnet_forward.1}
  #allocation0 [shape = 'u32[]', space=smem, size = 0x4, offset = 0x4, fixed_abs, tag = 'smem constant byte address 0x4 - core index']
  #allocation1 [shape = 'u32[144,128]{1,0:T(1,128)}', space=vmem, size = 0x12000, scoped, tag = 'internal scratch']
  %s0 = inlined_call_operand.vmem [shape: f32[128,32], index: 0, kind: input, shape index: {}]
  %s1 = inlined_call_operand.hbm [shape: bf16[32,128], index: 1, kind: input, shape index: {}]
  %s2 = inlined_call_operand.vmem [shape: f32[1,128], index: 2, kind: input, shape index: {}]
  %s3 = inlined_call_operand.vmem [shape: bf16[128,128], index: 3, kind: input, shape index: {}]
  %s4 = inlined_call_operand.vmem [shape: f32[1,128], index: 4, kind: input, shape index: {}]
  %s5 = inlined_call_operand.vmem [shape: bf16[128,128], index: 5, kind: input, shape index: {}]
  %s6 = inlined_call_operand.vmem [shape: f32[1,128], index: 6, kind: input, shape index: {}]
  %s7 = inlined_call_operand.vmem [shape: f32[8,128], index: 7, kind: output, shape index: {}]
  %s8 = sld [smem:[#allocation0]]
  $region42: #{patnet_forward.1} parent=0
    _
  %s10 = ssub.s32 1, %s8
  %s11 = scalar_select 0, %s10, %s8
  $region1: #{patnet_forward.1} parent=0
    #allocation2 [shape = 'u8[8192]{0}', space=vmem, size = 0x2000, scoped, tag = 'input window, operand 1, single buffered']
    #allocation3 [shape = 's32[1]{0}', space=sflag, size = 0x4, scoped, tag = 'scoped memory for patnet_forward.1']
    %12 = vsyncpa [#allocation3], 0
    // Predicated region
    $region2: #{patnet_forward.1} parent=1 // pred_check
      _
    $region3: #{patnet_forward.1} parent=1 // pred_check_branch
      %14 = sbr.rel (0) target = $region5
    $region4: #{patnet_forward.1} parent=1 // pred_region
      _
    $region5: #{patnet_forward.1} parent=1 // pred_fallthru
      _
    // Predicated region
    $region6: #{patnet_forward.1} parent=1 // pred_check
      _
    $region7: #{patnet_forward.1} parent=1 // pred_check_branch
      %16 = sbr.rel (0) target = $region9
    $region8: #{patnet_forward.1} parent=1 // pred_region
      %s18 = ssub.s32 256, 256
      %19 = vsyncadd [#allocation3], %s18
      %s20 = sshll.u32 [#allocation2], 4
      %s21 = int_to_ptr.vmem [resolvable:$true] %s20
      %26 = dma.hbm_to_vmem [thread:$0]  %s1, 256, %s21, [#allocation3], 64, 64, 4
    $region9: #{patnet_forward.1} parent=1 // pred_fallthru
      _
    // Predicated region
    $region10: #{patnet_forward.1} parent=1 // pred_check
      _
    $region11: #{patnet_forward.1} parent=1 // pred_check_branch
      %28 = sbr.rel (0) target = $region13
    $region12: #{patnet_forward.1} parent=1 // pred_region
      _
    $region13: #{patnet_forward.1} parent=1 // pred_fallthru
      _
    // Predicated region
    $region14: #{patnet_forward.1} parent=1 // pred_check
      _
    $region15: #{patnet_forward.1} parent=1 // pred_check_branch
      %30 = sbr.rel (0) target = $region17
    $region16: #{patnet_forward.1} parent=1 // pred_region
      _
    $region17: #{patnet_forward.1} parent=1 // pred_fallthru
      _
    // Predicated region
    $region18: #{patnet_forward.1} parent=1 // pred_check
      _
    $region19: #{patnet_forward.1} parent=1 // pred_check_branch
      %32 = sbr.rel (0) target = $region21
    $region20: #{patnet_forward.1} parent=1 // pred_region
      _
    $region21: #{patnet_forward.1} parent=1 // pred_fallthru
      _
    // Predicated region
    $region22: #{patnet_forward.1} parent=1 // pred_check
      _
    $region23: #{patnet_forward.1} parent=1 // pred_check_branch
      %34 = sbr.rel (0) target = $region25
    $region24: #{patnet_forward.1} parent=1 // pred_region
      _
    $region25: #{patnet_forward.1} parent=1 // pred_fallthru
      _
    // Predicated region
    $region26: #{patnet_forward.1} parent=1 // pred_check
      _
    $region27: #{patnet_forward.1} parent=1 // pred_check_branch
      %36 = sbr.rel (0) target = $region29
    $region28: #{patnet_forward.1} parent=1 // pred_region
      _
    $region29: #{patnet_forward.1} parent=1 // pred_fallthru
      _
    // Predicated region
    $region30: #{patnet_forward.1} parent=1 // pred_check
      _
    $region31: #{patnet_forward.1} parent=1 // pred_check_branch
      %38 = sbr.rel (0) target = $region33
    $region32: #{patnet_forward.1} parent=1 // pred_region
      %39 = dma.done [#allocation3], 256
    $region33: #{patnet_forward.1} parent=1 // pred_fallthru
      _
    %v41 = vld [vmem:[%s0] sm:$0xff]
    %v42 = vld [vmem:[%s0 + $0x8] sm:$0xff]
    %v43 = vld [vmem:[%s0 + $0x10] sm:$0xff]
    %v44 = vld [vmem:[%s0 + $0x18] sm:$0xff]
    %v45 = vld [vmem:[%s0 + $0x20] sm:$0xff]
    %v46 = vld [vmem:[%s0 + $0x28] sm:$0xff]
    %v47 = vld [vmem:[%s0 + $0x30] sm:$0xff]
    %v48 = vld [vmem:[%s0 + $0x38] sm:$0xff]
    %v49 = vld [vmem:[%s0 + $0x40] sm:$0xff]
    %v50 = vld [vmem:[%s0 + $0x48] sm:$0xff]
    %v51 = vld [vmem:[%s0 + $0x50] sm:$0xff]
    %v52 = vld [vmem:[%s0 + $0x58] sm:$0xff]
    %v53 = vld [vmem:[%s0 + $0x60] sm:$0xff]
    %v54 = vld [vmem:[%s0 + $0x68] sm:$0xff]
    %v55 = vld [vmem:[%s0 + $0x70] sm:$0xff]
    %v56 = vld [vmem:[%s0 + $0x78] sm:$0xff]
    %v57 = vpack.c.bf16 %v42, %v41
    %v58 = vpack.c.bf16 %v44, %v43
    %v59 = vpack.c.bf16 %v46, %v45
    %v60 = vpack.c.bf16 %v48, %v47
    %v61 = vpack.c.bf16 %v50, %v49
    %v62 = vpack.c.bf16 %v52, %v51
    %v63 = vpack.c.bf16 %v54, %v53
    %v64 = vpack.c.bf16 %v56, %v55
    %v65 = vld [vmem:[#allocation2] sm:$0xf]
    %v66 = vld [vmem:[#allocation2 + $0x4] sm:$0xf]
    %v67 = vld [vmem:[#allocation2 + $0x8] sm:$0xf]
    %v68 = vld [vmem:[#allocation2 + $0xc] sm:$0xf]
    %v69 = vld [vmem:[%s2] sm:$0x1]
    %v71 = vlaneseq
    %v72 = vshrl.u32 %v71, 7
    %v73 = vsub.s32 0, %v72
    %v74 = vrot.slane %v69, %v73
    %v80 = vunpack.c.l.b16 %v65
    %v81 = vunpack.c.l.b16 %v66
    %v82 = vunpack.c.l.b16 %v67
    %v83 = vunpack.c.l.b16 %v68
    %v84 = vpack.c.b16 %v81, %v80
    %v85 = vpack.c.b16 %v83, %v82
    %vm88 = vcmask 261120
    %v90 = vsel %vm88, %v57, 0
    %v93 = vsel %vm88, %v58, 0
    %v96 = vsel %vm88, %v59, 0
    %v99 = vsel %vm88, %v60, 0
    %v102 = vsel %vm88, %v61, 0
    %v105 = vsel %vm88, %v62, 0
    %v108 = vsel %vm88, %v63, 0
    %v111 = vsel %vm88, %v64, 0
    %113 = vmatprep.subr.bf16.mxu0 0
    %114 = vmatpush1.bf16.msra.mxu0 0
    %115 = vmatprep.subr.bf16.mxu0 0
    %116 = vmatpush1.bf16.msra.mxu0 0
    %117 = vmatprep.subr.bf16.mxu0 0
    %118 = vmatpush1.bf16.msra.mxu0 0
    %119 = vmatprep.subr.bf16.mxu0 0
    %120 = vmatpush1.bf16.msra.mxu0 0
    %121 = vmatprep.subr.bf16.mxu0 0
    %122 = vmatpush1.bf16.msra.mxu0 0
    %123 = vmatprep.subr.bf16.mxu0 0
    %124 = vmatpush1.bf16.msra.mxu0 0
    %125 = vmatprep.subr.bf16.mxu0 0
    %126 = vmatpush1.bf16.msra.mxu0 %v85
    %127 = vmatprep.subr.bf16.mxu0 0
    %128 = vmatpush1.bf16.msra.mxu0 %v84
    %129 = vmatprep.subr.bf16.mxu0 0
    %130 = vmatpush2.bf16.msra.mxu0 0
    %131 = vmatprep.subr.bf16.mxu0 0
    %132 = vmatpush2.bf16.msra.mxu0 0
    %133 = vmatprep.subr.bf16.mxu0 0
    %134 = vmatpush2.bf16.msra.mxu0 0
    %135 = vmatprep.subr.bf16.mxu0 0
    %136 = vmatpush2.bf16.msra.mxu0 0
    %137 = vmatprep.subr.bf16.mxu0 0
    %138 = vmatpush2.bf16.msra.mxu0 0
    %139 = vmatprep.subr.bf16.mxu0 0
    %140 = vmatpush2.bf16.msra.mxu0 0
    %141 = vmatprep.subr.bf16.mxu0 0
    %142 = vmatpush2.bf16.msra.mxu0 0
    %143 = vmatprep.subr.bf16.mxu0 0
    %144 = vmatpush2.bf16.msra.mxu0 0
    %145 = vmatprep.mubr.bf16.mxu0 0
    %146 = vmatmul.mubr.bf16.gmra.mxu0 %v90
    %v147 = vpop.f32.mrf.mxu0
    %v148 = vadd.f32 %v74, %v147
    %v149 = vpop.f32.mrf.mxu0
    %v150 = vpop.f32.mrf.mxu0
    %v151 = vadd.f32 %v74, %v150
    %v152 = vpop.f32.mrf.mxu0
    %153 = vmatprep.mubr.bf16.mxu0 0
    %154 = vmatmul.mubr.bf16.gmra.mxu0 %v93
    %v155 = vpop.f32.mrf.mxu0
    %v156 = vadd.f32 %v74, %v155
    %v157 = vpop.f32.mrf.mxu0
    %v158 = vpop.f32.mrf.mxu0
    %v159 = vadd.f32 %v74, %v158
    %v160 = vpop.f32.mrf.mxu0
    %161 = vmatprep.mubr.bf16.mxu0 0
    %162 = vmatmul.mubr.bf16.gmra.mxu0 %v96
    %v163 = vpop.f32.mrf.mxu0
    %v164 = vadd.f32 %v74, %v163
    %v165 = vpop.f32.mrf.mxu0
    %v166 = vpop.f32.mrf.mxu0
    %v167 = vadd.f32 %v74, %v166
    %v168 = vpop.f32.mrf.mxu0
    %169 = vmatprep.mubr.bf16.mxu0 0
    %170 = vmatmul.mubr.bf16.gmra.mxu0 %v99
    %v171 = vpop.f32.mrf.mxu0
    %v172 = vadd.f32 %v74, %v171
    %v173 = vpop.f32.mrf.mxu0
    %v174 = vpop.f32.mrf.mxu0
    %v175 = vadd.f32 %v74, %v174
    %v176 = vpop.f32.mrf.mxu0
    %177 = vmatprep.mubr.bf16.mxu0 0
    %178 = vmatmul.mubr.bf16.gmra.mxu0 %v102
    %v179 = vpop.f32.mrf.mxu0
    %v180 = vadd.f32 %v74, %v179
    %v181 = vpop.f32.mrf.mxu0
    %v182 = vpop.f32.mrf.mxu0
    %v183 = vadd.f32 %v74, %v182
    %v184 = vpop.f32.mrf.mxu0
    %185 = vmatprep.mubr.bf16.mxu0 0
    %186 = vmatmul.mubr.bf16.gmra.mxu0 %v105
    %v187 = vpop.f32.mrf.mxu0
    %v188 = vadd.f32 %v74, %v187
    %v189 = vpop.f32.mrf.mxu0
    %v190 = vpop.f32.mrf.mxu0
    %v191 = vadd.f32 %v74, %v190
    %v192 = vpop.f32.mrf.mxu0
    %193 = vmatprep.mubr.bf16.mxu0 0
    %194 = vmatmul.mubr.bf16.gmra.mxu0 %v108
    %v195 = vpop.f32.mrf.mxu0
    %v196 = vadd.f32 %v74, %v195
    %v197 = vpop.f32.mrf.mxu0
    %v198 = vpop.f32.mrf.mxu0
    %v199 = vadd.f32 %v74, %v198
    %v200 = vpop.f32.mrf.mxu0
    %201 = vmatprep.mubr.bf16.mxu0 0
    %202 = vmatmul.mubr.bf16.gmra.mxu0 %v111
    %v203 = vpop.f32.mrf.mxu0
    %v204 = vadd.f32 %v74, %v203
    %v205 = vpop.f32.mrf.mxu0
    %v206 = vpop.f32.mrf.mxu0
    %v207 = vadd.f32 %v74, %v206
    %v208 = vpop.f32.mrf.mxu0
    %209 = vdwg.mxu0
    %v210 = vmax.f32 %v148, 0.0
    %v211 = vmax.f32 %v151, 0.0
    %v212 = vmax.f32 %v156, 0.0
    %v213 = vmax.f32 %v159, 0.0
    %v214 = vmax.f32 %v164, 0.0
    %v215 = vmax.f32 %v167, 0.0
    %v216 = vmax.f32 %v172, 0.0
    %v217 = vmax.f32 %v175, 0.0
    %v218 = vmax.f32 %v180, 0.0
    %v219 = vmax.f32 %v183, 0.0
    %v220 = vmax.f32 %v188, 0.0
    %v221 = vmax.f32 %v191, 0.0
    %v222 = vmax.f32 %v196, 0.0
    %v223 = vmax.f32 %v199, 0.0
    %v224 = vmax.f32 %v204, 0.0
    %v225 = vmax.f32 %v207, 0.0
    %v226 = vpack.c.bf16 %v211, %v210
    %v227 = vpack.c.bf16 %v213, %v212
    %v228 = vpack.c.bf16 %v215, %v214
    %v229 = vpack.c.bf16 %v217, %v216
    %v230 = vpack.c.bf16 %v219, %v218
    %v231 = vpack.c.bf16 %v221, %v220
    %v232 = vpack.c.bf16 %v223, %v222
    %v233 = vpack.c.bf16 %v225, %v224
    %v234 = vld [vmem:[%s3] sm:$0xf]
    %v235 = vld [vmem:[%s3 + $0x4] sm:$0xf]
    %v236 = vld [vmem:[%s3 + $0x8] sm:$0xf]
    %v237 = vld [vmem:[%s3 + $0xc] sm:$0xf]
    %v238 = vld [vmem:[%s3 + $0x10] sm:$0xf]
    %v239 = vld [vmem:[%s3 + $0x14] sm:$0xf]
    %v240 = vld [vmem:[%s3 + $0x18] sm:$0xf]
    %v241 = vld [vmem:[%s3 + $0x1c] sm:$0xf]
    %v242 = vld [vmem:[%s3 + $0x20] sm:$0xf]
    %v243 = vld [vmem:[%s3 + $0x24] sm:$0xf]
    %v244 = vld [vmem:[%s3 + $0x28] sm:$0xf]
    %v245 = vld [vmem:[%s3 + $0x2c] sm:$0xf]
    %v246 = vld [vmem:[%s3 + $0x30] sm:$0xf]
    %v247 = vld [vmem:[%s3 + $0x34] sm:$0xf]
    %v248 = vld [vmem:[%s3 + $0x38] sm:$0xf]
    %v249 = vld [vmem:[%s3 + $0x3c] sm:$0xf]
    %v250 = vld [vmem:[%s4] sm:$0x1]
    %v252 = vlaneseq
    %v253 = vshrl.u32 %v252, 7
    %v254 = vsub.s32 0, %v253
    %v255 = vrot.slane %v250, %v254
    %v273 = vunpack.c.l.b16 %v234
    %v274 = vunpack.c.l.b16 %v235
    %v275 = vunpack.c.l.b16 %v236
    %v276 = vunpack.c.l.b16 %v237
    %v277 = vunpack.c.l.b16 %v238
    %v278 = vunpack.c.l.b16 %v239
    %v279 = vunpack.c.l.b16 %v240
    %v280 = vunpack.c.l.b16 %v241
    %v281 = vunpack.c.l.b16 %v242
    %v282 = vunpack.c.l.b16 %v243
    %v283 = vunpack.c.l.b16 %v244
    %v284 = vunpack.c.l.b16 %v245
    %v285 = vunpack.c.l.b16 %v246
    %v286 = vunpack.c.l.b16 %v247
    %v287 = vunpack.c.l.b16 %v248
    %v288 = vunpack.c.l.b16 %v249
    %v289 = vpack.c.b16 %v274, %v273
    %v290 = vpack.c.b16 %v276, %v275
    %v291 = vpack.c.b16 %v278, %v277
    %v292 = vpack.c.b16 %v280, %v279
    %v293 = vpack.c.b16 %v282, %v281
    %v294 = vpack.c.b16 %v284, %v283
    %v295 = vpack.c.b16 %v286, %v285
    %v296 = vpack.c.b16 %v288, %v287
    %305 = vmatprep.subr.bf16.mxu0 0
    %306 = vmatpush1.bf16.msra.mxu0 %v296
    %307 = vmatprep.subr.bf16.mxu0 0
    %308 = vmatpush1.bf16.msra.mxu0 %v295
    %309 = vmatprep.subr.bf16.mxu0 0
    %310 = vmatpush1.bf16.msra.mxu0 %v294
    %311 = vmatprep.subr.bf16.mxu0 0
    %312 = vmatpush1.bf16.msra.mxu0 %v293
    %313 = vmatprep.subr.bf16.mxu0 0
    %314 = vmatpush1.bf16.msra.mxu0 %v292
    %315 = vmatprep.subr.bf16.mxu0 0
    %316 = vmatpush1.bf16.msra.mxu0 %v291
    %317 = vmatprep.subr.bf16.mxu0 0
    %318 = vmatpush1.bf16.msra.mxu0 %v290
    %319 = vmatprep.subr.bf16.mxu0 0
    %320 = vmatpush1.bf16.msra.mxu0 %v289
    %321 = vmatprep.subr.bf16.mxu0 0
    %322 = vmatpush2.bf16.msra.mxu0 0
    %323 = vmatprep.subr.bf16.mxu0 0
    %324 = vmatpush2.bf16.msra.mxu0 0
    %325 = vmatprep.subr.bf16.mxu0 0
    %326 = vmatpush2.bf16.msra.mxu0 0
    %327 = vmatprep.subr.bf16.mxu0 0
    %328 = vmatpush2.bf16.msra.mxu0 0
    %329 = vmatprep.subr.bf16.mxu0 0
    %330 = vmatpush2.bf16.msra.mxu0 0
    %331 = vmatprep.subr.bf16.mxu0 0
    %332 = vmatpush2.bf16.msra.mxu0 0
    %333 = vmatprep.subr.bf16.mxu0 0
    %334 = vmatpush2.bf16.msra.mxu0 0
    %335 = vmatprep.subr.bf16.mxu0 0
    %336 = vmatpush2.bf16.msra.mxu0 0
    %337 = vmatprep.mubr.bf16.mxu0 0
    %338 = vmatmul.mubr.bf16.gmra.mxu0 %v226
    %v339 = vpop.f32.mrf.mxu0
    %v340 = vadd.f32 %v255, %v339
    %v341 = vpop.f32.mrf.mxu0
    %v342 = vpop.f32.mrf.mxu0
    %v343 = vadd.f32 %v255, %v342
    %v344 = vpop.f32.mrf.mxu0
    %345 = vmatprep.mubr.bf16.mxu0 0
    %346 = vmatmul.mubr.bf16.gmra.mxu0 %v227
    %v347 = vpop.f32.mrf.mxu0
    %v348 = vadd.f32 %v255, %v347
    %v349 = vpop.f32.mrf.mxu0
    %v350 = vpop.f32.mrf.mxu0
    %v351 = vadd.f32 %v255, %v350
    %v352 = vpop.f32.mrf.mxu0
    %353 = vmatprep.mubr.bf16.mxu0 0
    %354 = vmatmul.mubr.bf16.gmra.mxu0 %v228
    %v355 = vpop.f32.mrf.mxu0
    %v356 = vadd.f32 %v255, %v355
    %v357 = vpop.f32.mrf.mxu0
    %v358 = vpop.f32.mrf.mxu0
    %v359 = vadd.f32 %v255, %v358
    %v360 = vpop.f32.mrf.mxu0
    %361 = vmatprep.mubr.bf16.mxu0 0
    %362 = vmatmul.mubr.bf16.gmra.mxu0 %v229
    %v363 = vpop.f32.mrf.mxu0
    %v364 = vadd.f32 %v255, %v363
    %v365 = vpop.f32.mrf.mxu0
    %v366 = vpop.f32.mrf.mxu0
    %v367 = vadd.f32 %v255, %v366
    %v368 = vpop.f32.mrf.mxu0
    %369 = vmatprep.mubr.bf16.mxu0 0
    %370 = vmatmul.mubr.bf16.gmra.mxu0 %v230
    %v371 = vpop.f32.mrf.mxu0
    %v372 = vadd.f32 %v255, %v371
    %v373 = vpop.f32.mrf.mxu0
    %v374 = vpop.f32.mrf.mxu0
    %v375 = vadd.f32 %v255, %v374
    %v376 = vpop.f32.mrf.mxu0
    %377 = vmatprep.mubr.bf16.mxu0 0
    %378 = vmatmul.mubr.bf16.gmra.mxu0 %v231
    %v379 = vpop.f32.mrf.mxu0
    %v380 = vadd.f32 %v255, %v379
    %v381 = vpop.f32.mrf.mxu0
    %v382 = vpop.f32.mrf.mxu0
    %v383 = vadd.f32 %v255, %v382
    %v384 = vpop.f32.mrf.mxu0
    %385 = vmatprep.mubr.bf16.mxu0 0
    %386 = vmatmul.mubr.bf16.gmra.mxu0 %v232
    %v387 = vpop.f32.mrf.mxu0
    %v388 = vadd.f32 %v255, %v387
    %v389 = vpop.f32.mrf.mxu0
    %v390 = vpop.f32.mrf.mxu0
    %v391 = vadd.f32 %v255, %v390
    %v392 = vpop.f32.mrf.mxu0
    %393 = vmatprep.mubr.bf16.mxu0 0
    %394 = vmatmul.mubr.bf16.gmra.mxu0 %v233
    %v395 = vpop.f32.mrf.mxu0
    %v396 = vadd.f32 %v255, %v395
    %v397 = vpop.f32.mrf.mxu0
    %v398 = vpop.f32.mrf.mxu0
    %v399 = vadd.f32 %v255, %v398
    %v400 = vpop.f32.mrf.mxu0
    %401 = vdwg.mxu0
    %v402 = vmax.f32 %v340, 0.0
    %v403 = vmax.f32 %v343, 0.0
    %v404 = vmax.f32 %v348, 0.0
    %v405 = vmax.f32 %v351, 0.0
    %v406 = vmax.f32 %v356, 0.0
    %v407 = vmax.f32 %v359, 0.0
    %v408 = vmax.f32 %v364, 0.0
    %v409 = vmax.f32 %v367, 0.0
    %v410 = vmax.f32 %v372, 0.0
    %v411 = vmax.f32 %v375, 0.0
    %v412 = vmax.f32 %v380, 0.0
    %v413 = vmax.f32 %v383, 0.0
    %v414 = vmax.f32 %v388, 0.0
    %v415 = vmax.f32 %v391, 0.0
    %v416 = vmax.f32 %v396, 0.0
    %v417 = vmax.f32 %v399, 0.0
    %v418 = vpack.c.bf16 %v403, %v402
    %v419 = vpack.c.bf16 %v405, %v404
    %v420 = vpack.c.bf16 %v407, %v406
    %v421 = vpack.c.bf16 %v409, %v408
    %v422 = vpack.c.bf16 %v411, %v410
    %v423 = vpack.c.bf16 %v413, %v412
    %v424 = vpack.c.bf16 %v415, %v414
    %v425 = vpack.c.bf16 %v417, %v416
    %v426 = vld [vmem:[%s5] sm:$0xf]
    %v427 = vld [vmem:[%s5 + $0x4] sm:$0xf]
    %v428 = vld [vmem:[%s5 + $0x8] sm:$0xf]
    %v429 = vld [vmem:[%s5 + $0xc] sm:$0xf]
    %v430 = vld [vmem:[%s5 + $0x10] sm:$0xf]
    %v431 = vld [vmem:[%s5 + $0x14] sm:$0xf]
    %v432 = vld [vmem:[%s5 + $0x18] sm:$0xf]
    %v433 = vld [vmem:[%s5 + $0x1c] sm:$0xf]
    %v434 = vld [vmem:[%s5 + $0x20] sm:$0xf]
    %v435 = vld [vmem:[%s5 + $0x24] sm:$0xf]
    %v436 = vld [vmem:[%s5 + $0x28] sm:$0xf]
    %v437 = vld [vmem:[%s5 + $0x2c] sm:$0xf]
    %v438 = vld [vmem:[%s5 + $0x30] sm:$0xf]
    %v439 = vld [vmem:[%s5 + $0x34] sm:$0xf]
    %v440 = vld [vmem:[%s5 + $0x38] sm:$0xf]
    %v441 = vld [vmem:[%s5 + $0x3c] sm:$0xf]
    %v442 = vld [vmem:[%s6] sm:$0x1]
    %v444 = vlaneseq
    %v445 = vshrl.u32 %v444, 7
    %v446 = vsub.s32 0, %v445
    %v447 = vrot.slane %v442, %v446
    %v465 = vunpack.c.l.b16 %v426
    %v466 = vunpack.c.l.b16 %v427
    %v467 = vunpack.c.l.b16 %v428
    %v468 = vunpack.c.l.b16 %v429
    %v469 = vunpack.c.l.b16 %v430
    %v470 = vunpack.c.l.b16 %v431
    %v471 = vunpack.c.l.b16 %v432
    %v472 = vunpack.c.l.b16 %v433
    %v473 = vunpack.c.l.b16 %v434
    %v474 = vunpack.c.l.b16 %v435
    %v475 = vunpack.c.l.b16 %v436
    %v476 = vunpack.c.l.b16 %v437
    %v477 = vunpack.c.l.b16 %v438
    %v478 = vunpack.c.l.b16 %v439
    %v479 = vunpack.c.l.b16 %v440
    %v480 = vunpack.c.l.b16 %v441
    %v481 = vpack.c.b16 %v466, %v465
    %v482 = vpack.c.b16 %v468, %v467
    %v483 = vpack.c.b16 %v470, %v469
    %v484 = vpack.c.b16 %v472, %v471
    %v485 = vpack.c.b16 %v474, %v473
    %v486 = vpack.c.b16 %v476, %v475
    %v487 = vpack.c.b16 %v478, %v477
    %v488 = vpack.c.b16 %v480, %v479
    %497 = vmatprep.subr.bf16.mxu0 0
    %498 = vmatpush1.bf16.msra.mxu0 %v488
    %499 = vmatprep.subr.bf16.mxu0 0
    %500 = vmatpush1.bf16.msra.mxu0 %v487
    %501 = vmatprep.subr.bf16.mxu0 0
    %502 = vmatpush1.bf16.msra.mxu0 %v486
    %503 = vmatprep.subr.bf16.mxu0 0
    %504 = vmatpush1.bf16.msra.mxu0 %v485
    %505 = vmatprep.subr.bf16.mxu0 0
    %506 = vmatpush1.bf16.msra.mxu0 %v484
    %507 = vmatprep.subr.bf16.mxu0 0
    %508 = vmatpush1.bf16.msra.mxu0 %v483
    %509 = vmatprep.subr.bf16.mxu0 0
    %510 = vmatpush1.bf16.msra.mxu0 %v482
    %511 = vmatprep.subr.bf16.mxu0 0
    %512 = vmatpush1.bf16.msra.mxu0 %v481
    %513 = vmatprep.subr.bf16.mxu0 0
    %514 = vmatpush2.bf16.msra.mxu0 0
    %515 = vmatprep.subr.bf16.mxu0 0
    %516 = vmatpush2.bf16.msra.mxu0 0
    %517 = vmatprep.subr.bf16.mxu0 0
    %518 = vmatpush2.bf16.msra.mxu0 0
    %519 = vmatprep.subr.bf16.mxu0 0
    %520 = vmatpush2.bf16.msra.mxu0 0
    %521 = vmatprep.subr.bf16.mxu0 0
    %522 = vmatpush2.bf16.msra.mxu0 0
    %523 = vmatprep.subr.bf16.mxu0 0
    %524 = vmatpush2.bf16.msra.mxu0 0
    %525 = vmatprep.subr.bf16.mxu0 0
    %526 = vmatpush2.bf16.msra.mxu0 0
    %527 = vmatprep.subr.bf16.mxu0 0
    %528 = vmatpush2.bf16.msra.mxu0 0
    %529 = vmatprep.mubr.bf16.mxu0 0
    %530 = vmatmul.mubr.bf16.gmra.mxu0 %v418
    %v531 = vpop.f32.mrf.mxu0
    %v532 = vadd.f32 %v447, %v531
    %v533 = vpop.f32.mrf.mxu0
    %v534 = vpop.f32.mrf.mxu0
    %v535 = vadd.f32 %v447, %v534
    %v536 = vpop.f32.mrf.mxu0
    %537 = vmatprep.mubr.bf16.mxu0 0
    %538 = vmatmul.mubr.bf16.gmra.mxu0 %v419
    %v539 = vpop.f32.mrf.mxu0
    %v540 = vadd.f32 %v447, %v539
    %v541 = vpop.f32.mrf.mxu0
    %v542 = vpop.f32.mrf.mxu0
    %v543 = vadd.f32 %v447, %v542
    %v544 = vpop.f32.mrf.mxu0
    %545 = vmatprep.mubr.bf16.mxu0 0
    %546 = vmatmul.mubr.bf16.gmra.mxu0 %v420
    %v547 = vpop.f32.mrf.mxu0
    %v548 = vadd.f32 %v447, %v547
    %v549 = vpop.f32.mrf.mxu0
    %v550 = vpop.f32.mrf.mxu0
    %v551 = vadd.f32 %v447, %v550
    %v552 = vpop.f32.mrf.mxu0
    %553 = vmatprep.mubr.bf16.mxu0 0
    %554 = vmatmul.mubr.bf16.gmra.mxu0 %v421
    %v555 = vpop.f32.mrf.mxu0
    %v556 = vadd.f32 %v447, %v555
    %v557 = vpop.f32.mrf.mxu0
    %v558 = vpop.f32.mrf.mxu0
    %v559 = vadd.f32 %v447, %v558
    %v560 = vpop.f32.mrf.mxu0
    %561 = vmatprep.mubr.bf16.mxu0 0
    %562 = vmatmul.mubr.bf16.gmra.mxu0 %v422
    %v563 = vpop.f32.mrf.mxu0
    %v564 = vadd.f32 %v447, %v563
    %v565 = vpop.f32.mrf.mxu0
    %v566 = vpop.f32.mrf.mxu0
    %v567 = vadd.f32 %v447, %v566
    %v568 = vpop.f32.mrf.mxu0
    %569 = vmatprep.mubr.bf16.mxu0 0
    %570 = vmatmul.mubr.bf16.gmra.mxu0 %v423
    %v571 = vpop.f32.mrf.mxu0
    %v572 = vadd.f32 %v447, %v571
    %v573 = vpop.f32.mrf.mxu0
    %v574 = vpop.f32.mrf.mxu0
    %v575 = vadd.f32 %v447, %v574
    %v576 = vpop.f32.mrf.mxu0
    %577 = vmatprep.mubr.bf16.mxu0 0
    %578 = vmatmul.mubr.bf16.gmra.mxu0 %v424
    %v579 = vpop.f32.mrf.mxu0
    %v580 = vadd.f32 %v447, %v579
    %v581 = vpop.f32.mrf.mxu0
    %v582 = vpop.f32.mrf.mxu0
    %v583 = vadd.f32 %v447, %v582
    %v584 = vpop.f32.mrf.mxu0
    %585 = vmatprep.mubr.bf16.mxu0 0
    %586 = vmatmul.mubr.bf16.gmra.mxu0 %v425
    %v587 = vpop.f32.mrf.mxu0
    %v588 = vadd.f32 %v447, %v587
    %v589 = vpop.f32.mrf.mxu0
    %v590 = vpop.f32.mrf.mxu0
    %v591 = vadd.f32 %v447, %v590
    %v592 = vpop.f32.mrf.mxu0
    %593 = vdwg.mxu0
    %594 = vxpose.xlu0.b32.start [1/16] %v532, 128
    %595 = vxpose.xlu0.b32.cont [2/16] %v535, 128
    %596 = vxpose.xlu0.b32.cont [3/16] %v540, 128
    %597 = vxpose.xlu0.b32.cont [4/16] %v543, 128
    %598 = vxpose.xlu0.b32.cont [5/16] %v548, 128
    %599 = vxpose.xlu0.b32.cont [6/16] %v551, 128
    %600 = vxpose.xlu0.b32.cont [7/16] %v556, 128
    %601 = vxpose.xlu0.b32.cont [8/16] %v559, 128
    %602 = vxpose.xlu0.b32.cont [9/16] %v564, 128
    %603 = vxpose.xlu0.b32.cont [10/16] %v567, 128
    %604 = vxpose.xlu0.b32.cont [11/16] %v572, 128
    %605 = vxpose.xlu0.b32.cont [12/16] %v575, 128
    %606 = vxpose.xlu0.b32.cont [13/16] %v580, 128
    %607 = vxpose.xlu0.b32.cont [14/16] %v583, 128
    %608 = vxpose.xlu0.b32.cont [15/16] %v588, 128
    %609 = vxpose.xlu0.b32.end [16/16] %v591, 128
    %v610 = vpop.trf.xlu0
    %v611 = vpop.trf.xlu0
    %v612 = vpop.trf.xlu0
    %v613 = vpop.trf.xlu0
    %v614 = vpop.trf.xlu0
    %v615 = vpop.trf.xlu0
    %v616 = vpop.trf.xlu0
    %v617 = vpop.trf.xlu0
    %v618 = vpop.trf.xlu0
    %v619 = vpop.trf.xlu0
    %v620 = vpop.trf.xlu0
    %v621 = vpop.trf.xlu0
    %v622 = vpop.trf.xlu0
    %v623 = vpop.trf.xlu0
    %v624 = vpop.trf.xlu0
    %v625 = vpop.trf.xlu0
    %626 = vst [vmem:[%s7] sm:$0xff] %v610
    // Predicated region
    $region34: #{patnet_forward.1} parent=1 // pred_check
      _
    $region35: #{patnet_forward.1} parent=1 // pred_check_branch
      %628 = sbr.rel (0) target = $region37
    $region36: #{patnet_forward.1} parent=1 // pred_region
      _
    $region37: #{patnet_forward.1} parent=1 // pred_fallthru
      _
    // Predicated region
    $region38: #{patnet_forward.1} parent=1 // pred_check
      _
    $region39: #{patnet_forward.1} parent=1 // pred_check_branch
      %630 = sbr.rel (0) target = $region41
    $region40: #{patnet_forward.1} parent=1 // pred_region
      _
    $region41: #{patnet_forward.1} parent=1 // pred_fallthru
      _
    %631 = vsyncpa [#allocation3], 1

</llo_original>
